<compile_context>
chip_gen: v6e
topology: v6e:2x2x1
jax: 0.10.0
libtpu: 0.0.40
codegen_flags: <defaults>
</compile_context>

<pallas_src>
import functools

import jax
import jax.numpy as jnp
from jax.experimental import pallas as pl
from jax.experimental.pallas import tpu as pltpu

LANE = 128      # last dims padded to multiples of the lane width
SUBLANE = 8     # batch tiles rounded to multiples of the sublane width


def _round_up(n, m):
    return -(-n // m) * m


def _pad_axis(a, axis, multiple):
    pad = (-a.shape[axis]) % multiple
    if pad == 0:
        return a
    widths = [(0, 0)] * a.ndim
    widths[axis] = (0, pad)
    return jnp.pad(a, widths)


def _mlp_kernel(x_ref, w0_ref, b0_ref, w1_ref, b1_ref, w2_ref, b2_ref, o_ref):
    # layer 0: (TB, In_p) @ (In_p, H_p) + (1, H_p) -> tanh
    h = jnp.tanh(
        jnp.dot(x_ref[...], w0_ref[...], preferred_element_type=jnp.float32)
        + b0_ref[...]
    )
    # layer 1: (TB, H_p) @ (H_p, H_p) + (1, H_p) -> tanh
    h = jnp.tanh(
        jnp.dot(h, w1_ref[...], preferred_element_type=jnp.float32)
        + b1_ref[...]
    )
    # layer 2: (TB, H_p) @ (H_p, O_p) + (1, O_p) -> tanh
    o_ref[...] = jnp.tanh(
        jnp.dot(h, w2_ref[...], preferred_element_type=jnp.float32)
        + b2_ref[...]
    ).astype(o_ref.dtype)


def init_params(key, in_size, hidden_size, out_size):
    """Deterministic init matching nn.Linear shapes (weights stored (in, out))."""
    ks = jax.random.split(key, 6)

    def uniform(k, shape, fan_in):
        bound = 1.0 / jnp.sqrt(fan_in)
        return jax.random.uniform(k, shape, jnp.float32, -bound, bound)

    return {
        # torch weight is (out, in); we store (in, out) so the kernel does x @ W
        "w0": uniform(ks[0], (in_size, hidden_size), in_size),
        "b0": uniform(ks[1], (1, hidden_size), in_size),
        "w1": uniform(ks[2], (hidden_size, hidden_size), hidden_size),
        "b1": uniform(ks[3], (1, hidden_size), hidden_size),
        "w2": uniform(ks[4], (hidden_size, out_size), hidden_size),
        "b2": uniform(ks[5], (1, out_size), hidden_size),
    }


def prepare_params(params):
    """One-time zero-padding of weights/biases to lane-dense (x128) dims.

    Call this ONCE after init (outside the jitted forward). Zero padding is exact
    for matmul + bias + tanh: padded rows/cols contribute 0 and tanh(0) = 0.
    """
    return {
        "w0": _pad_axis(_pad_axis(params["w0"], 0, LANE), 1, LANE),  # (In_p, H_p)
        "b0": _pad_axis(params["b0"], 1, LANE),                      # (1,   H_p)
        "w1": _pad_axis(_pad_axis(params["w1"], 0, LANE), 1, LANE),  # (H_p, H_p)
        "b1": _pad_axis(params["b1"], 1, LANE),                      # (1,   H_p)
        "w2": _pad_axis(_pad_axis(params["w2"], 0, LANE), 1, LANE),  # (H_p, O_p)
        "b2": _pad_axis(params["b2"], 1, LANE),                      # (1,   O_p)
    }


@functools.partial(jax.jit, static_argnames=("out_size", "tb"))
def torch_module_forward(x, padded_params, out_size, *, tb=256):
    """Replicates TorchModule.forward.

    x: (batch, in_size) float32
    padded_params: output of prepare_params() (weights pre-padded, lane-dense).
    out_size: original (un-padded) output feature count.
    The torch unsqueeze(0)/[0] pair is a shape no-op for the math.
    """
    w0p, b0p = padded_params["w0"], padded_params["b0"]
    w1p, b1p = padded_params["w1"], padded_params["b1"]
    w2p, b2p = padded_params["w2"], padded_params["b2"]

    batch, in_size = x.shape
    in_p, hidden_p = w0p.shape
    out_p = w2p.shape[1]

    # --- pad x's feature dim (layer-0 K) to the padded weight's K: lane-dense load
    xf = _pad_axis(x, 1, LANE)
    assert xf.shape[1] == in_p, (xf.shape, in_p)

    # --- batch tiling: balance tile size to minimize pad waste; keep >=2 grid
    # steps when batch > 8 so both v7x TensorCores get work under "parallel".
    steps = max(1, -(-batch // tb))
    if batch > SUBLANE:
        steps = max(steps, 2)
    tb_eff = _round_up(-(-batch // steps), SUBLANE)
    batch_p = tb_eff * steps
    pad_rows = batch_p - batch
    xp = jnp.pad(xf, ((0, pad_rows), (0, 0))) if pad_rows else xf
    grid = (steps,)

    # --- explicit VMEM budget: 2x pipelined x/out tiles + single-buffered weights
    # + two (TB, H_p) intermediates, with headroom.
    bytes_f32 = 4
    weight_bytes = bytes_f32 * (in_p * hidden_p + hidden_p * hidden_p
                                + hidden_p * out_p + 2 * hidden_p + out_p)
    io_tile_bytes = 2 * bytes_f32 * tb_eff * (in_p + out_p)
    interm_bytes = 2 * bytes_f32 * tb_eff * hidden_p
    vmem_limit = int(1.5 * (weight_bytes + io_tile_bytes + interm_bytes)) + (4 << 20)
    vmem_limit = min(max(vmem_limit, 8 << 20), 96 << 20)

    # Constant-index blocks don't need double-buffering: single-buffer the weights.
    def _resident(shape):
        return pl.BlockSpec(shape, lambda i: (0, 0), pipeline_mode=pl.Buffered(1))

    # Default-precision matmul = 1 MXU pass, so flops = 2*M*K*N per layer.
    cost = pl.CostEstimate(
        flops=2 * batch_p * (in_p * hidden_p + hidden_p * hidden_p + hidden_p * out_p),
        transcendentals=batch_p * (2 * hidden_p + out_p),
        bytes_accessed=bytes_f32 * (batch_p * (in_p + out_p)
                                    + in_p * hidden_p + hidden_p * hidden_p
                                    + hidden_p * out_p + 2 * hidden_p + out_p),
    )

    out_padded = pl.pallas_call(
        _mlp_kernel,
        out_shape=jax.ShapeDtypeStruct((batch_p, out_p), jnp.float32),
        grid=grid,
        in_specs=[
            pl.BlockSpec((tb_eff, in_p), lambda i: (i, 0)),   # x tile, pipelined
            _resident((in_p, hidden_p)),                      # weights stay resident
            _resident((1, hidden_p)),
            _resident((hidden_p, hidden_p)),
            _resident((1, hidden_p)),
            _resident((hidden_p, out_p)),
            _resident((1, out_p)),
        ],
        out_specs=pl.BlockSpec((tb_eff, out_p), lambda i: (i, 0)),
        compiler_params=pltpu.CompilerParams(
            dimension_semantics=("parallel",),
            vmem_limit_bytes=vmem_limit,
        ),
        cost_estimate=cost,
    )(xp, w0p, b0p, w1p, b1p, w2p, b2p)

    return out_padded[:batch, :out_size]


if __name__ == "__main__":
    key = jax.random.PRNGKey(0)
    in_size, hidden_size, out_size = 32, 64, 16
    batch = 8

    k_x, k_p = jax.random.split(key)
    x = jax.random.normal(k_x, (batch, in_size), jnp.float32)
    params = init_params(k_p, in_size, hidden_size, out_size)
    padded_params = prepare_params(params)   # one-time param prep, not per forward

    y = torch_module_forward(x, padded_params, out_size)
    jax.block_until_ready(y)

    # reference check in plain JAX (same default TPU matmul precision as the kernel)
    ref = x
    for w, b in (("w0", "b0"), ("w1", "b1"), ("w2", "b2")):
        ref = jnp.tanh(ref @ params[w] + params[b])
    assert y.shape == (batch, out_size)
    assert jnp.allclose(y, ref, atol=1e-2, rtol=1e-2), float(jnp.max(jnp.abs(y - ref)))

    print("KERNEL_OK")
</pallas_src>

<mosaic_0001>
module attributes {stable_mosaic.version = 11 : i64} {
  func.func @_mlp_kernel(%arg0: i32, %arg1: memref<8x128xf32, #tpu.memory_space<vmem>>, %arg2: memref<128x128xf32, #tpu.memory_space<vmem>>, %arg3: memref<1x128xf32, #tpu.memory_space<vmem>>, %arg4: memref<128x128xf32, #tpu.memory_space<vmem>>, %arg5: memref<1x128xf32, #tpu.memory_space<vmem>>, %arg6: memref<128x128xf32, #tpu.memory_space<vmem>>, %arg7: memref<1x128xf32, #tpu.memory_space<vmem>>, %arg8: memref<8x128xf32, #tpu.memory_space<vmem>>) attributes {dimension_semantics = [#tpu.dimension_semantics<parallel>], iteration_bounds = array<i64: 1>, scalar_prefetch = 0 : i64, scratch_operands = 0 : i64, tpu.core_type = #tpu.core_type<tc>, window_params = [{transform_indices = @transform_0, window_bounds = array<i64: 8, 128>}, {pipeline_mode = #tpu.pipeline_mode<synchronous>, transform_indices = @transform_1, window_bounds = array<i64: 128, 128>}, {pipeline_mode = #tpu.pipeline_mode<synchronous>, transform_indices = @transform_2, window_bounds = array<i64: 1, 128>}, {pipeline_mode = #tpu.pipeline_mode<synchronous>, transform_indices = @transform_3, window_bounds = array<i64: 128, 128>}, {pipeline_mode = #tpu.pipeline_mode<synchronous>, transform_indices = @transform_4, window_bounds = array<i64: 1, 128>}, {pipeline_mode = #tpu.pipeline_mode<synchronous>, transform_indices = @transform_5, window_bounds = array<i64: 128, 128>}, {pipeline_mode = #tpu.pipeline_mode<synchronous>, transform_indices = @transform_6, window_bounds = array<i64: 1, 128>}, {transform_indices = @transform_7, window_bounds = array<i64: 8, 128>}]} {
    %c0 = arith.constant 0 : index
    %c0_0 = arith.constant 0 : index
    %0 = vector.load %arg1[%c0, %c0_0] : memref<8x128xf32, #tpu.memory_space<vmem>>, vector<8x128xf32>
    %c0_1 = arith.constant 0 : index
    %c0_2 = arith.constant 0 : index
    %1 = vector.load %arg2[%c0_1, %c0_2] : memref<128x128xf32, #tpu.memory_space<vmem>>, vector<128x128xf32>
    %cst = arith.constant dense<0.000000e+00> : vector<8x128xf32>
    %2 = tpu.matmul %0, %1, %cst {dimension_numbers = #tpu.dot_dimension_numbers<[1], [0], [0], [1], [0, 0, 1, 1], [], []>} : vector<8x128xf32>, vector<128x128xf32>, vector<8x128xf32> -> vector<8x128xf32>
    %c0_3 = arith.constant 0 : index
    %c0_4 = arith.constant 0 : index
    %3 = vector.load %arg3[%c0_3, %c0_4] : memref<1x128xf32, #tpu.memory_space<vmem>>, vector<1x128xf32>
    %4 = vector.broadcast %3 : vector<1x128xf32> to vector<8x128xf32>
    %5 = arith.addf %2, %4 : vector<8x128xf32>
    %6 = math.tanh %5 : vector<8x128xf32>
    %c0_5 = arith.constant 0 : index
    %c0_6 = arith.constant 0 : index
    %7 = vector.load %arg4[%c0_5, %c0_6] : memref<128x128xf32, #tpu.memory_space<vmem>>, vector<128x128xf32>
    %cst_7 = arith.constant dense<0.000000e+00> : vector<8x128xf32>
    %8 = tpu.matmul %6, %7, %cst_7 {dimension_numbers = #tpu.dot_dimension_numbers<[1], [0], [0], [1], [0, 0, 1, 1], [], []>} : vector<8x128xf32>, vector<128x128xf32>, vector<8x128xf32> -> vector<8x128xf32>
    %c0_8 = arith.constant 0 : index
    %c0_9 = arith.constant 0 : index
    %9 = vector.load %arg5[%c0_8, %c0_9] : memref<1x128xf32, #tpu.memory_space<vmem>>, vector<1x128xf32>
    %10 = vector.broadcast %9 : vector<1x128xf32> to vector<8x128xf32>
    %11 = arith.addf %8, %10 : vector<8x128xf32>
    %12 = math.tanh %11 : vector<8x128xf32>
    %c0_10 = arith.constant 0 : index
    %c0_11 = arith.constant 0 : index
    %13 = vector.load %arg6[%c0_10, %c0_11] : memref<128x128xf32, #tpu.memory_space<vmem>>, vector<128x128xf32>
    %cst_12 = arith.constant dense<0.000000e+00> : vector<8x128xf32>
    %14 = tpu.matmul %12, %13, %cst_12 {dimension_numbers = #tpu.dot_dimension_numbers<[1], [0], [0], [1], [0, 0, 1, 1], [], []>} : vector<8x128xf32>, vector<128x128xf32>, vector<8x128xf32> -> vector<8x128xf32>
    %c0_13 = arith.constant 0 : index
    %c0_14 = arith.constant 0 : index
    %15 = vector.load %arg7[%c0_13, %c0_14] : memref<1x128xf32, #tpu.memory_space<vmem>>, vector<1x128xf32>
    %16 = vector.broadcast %15 : vector<1x128xf32> to vector<8x128xf32>
    %17 = arith.addf %14, %16 : vector<8x128xf32>
    %18 = math.tanh %17 : vector<8x128xf32>
    %c0_15 = arith.constant 0 : index
    %c0_16 = arith.constant 0 : index
    %19 = vector.load %arg8[%c0_15, %c0_16] : memref<8x128xf32, #tpu.memory_space<vmem>>, vector<8x128xf32>
    tpu.vector_store %arg8[%c0_15, %c0_16], %18 {strides = array<i32>} : memref<8x128xf32, #tpu.memory_space<vmem>>, vector<8x128xf32>,
    return
  }
  func.func @transform_0(%arg0: i32) -> (i32, i32) {
    %c0_i32 = arith.constant 0 : i32
    %c0_i32_0 = arith.constant 0 : i32
    return %arg0, %c0_i32 : i32, i32
  }
  func.func @transform_1(%arg0: i32) -> (i32, i32) {
    %c0_i32 = arith.constant 0 : i32
    %c0_i32_0 = arith.constant 0 : i32
    %c0_i32_1 = arith.constant 0 : i32
    return %c0_i32, %c0_i32_0 : i32, i32
  }
  func.func @transform_2(%arg0: i32) -> (i32, i32) {
    %c0_i32 = arith.constant 0 : i32
    %c0_i32_0 = arith.constant 0 : i32
    %c0_i32_1 = arith.constant 0 : i32
    return %c0_i32, %c0_i32_0 : i32, i32
  }
  func.func @transform_3(%arg0: i32) -> (i32, i32) {
    %c0_i32 = arith.constant 0 : i32
    %c0_i32_0 = arith.constant 0 : i32
    %c0_i32_1 = arith.constant 0 : i32
    return %c0_i32, %c0_i32_0 : i32, i32
  }
  func.func @transform_4(%arg0: i32) -> (i32, i32) {
    %c0_i32 = arith.constant 0 : i32
    %c0_i32_0 = arith.constant 0 : i32
    %c0_i32_1 = arith.constant 0 : i32
    return %c0_i32, %c0_i32_0 : i32, i32
  }
  func.func @transform_5(%arg0: i32) -> (i32, i32) {
    %c0_i32 = arith.constant 0 : i32
    %c0_i32_0 = arith.constant 0 : i32
    %c0_i32_1 = arith.constant 0 : i32
    return %c0_i32, %c0_i32_0 : i32, i32
  }
  func.func @transform_6(%arg0: i32) -> (i32, i32) {
    %c0_i32 = arith.constant 0 : i32
    %c0_i32_0 = arith.constant 0 : i32
    %c0_i32_1 = arith.constant 0 : i32
    return %c0_i32, %c0_i32_0 : i32, i32
  }
  func.func @transform_7(%arg0: i32) -> (i32, i32) {
    %c0_i32 = arith.constant 0 : i32
    %c0_i32_0 = arith.constant 0 : i32
    return %arg0, %c0_i32 : i32, i32
  }
}

</mosaic_0001>

<llo_original>
// kernel: torch_module_forward.1
$region0: #{torch_module_forward.1}
  #allocation0 [shape = 'u32[]', space=smem, size = 0x4, offset = 0x4, fixed_abs, tag = 'smem constant byte address 0x4 - core index']
  #allocation1 [shape = 'u32[144,128]{1,0:T(1,128)}', space=vmem, size = 0x12000, scoped, tag = 'internal scratch']
  %s0 = inlined_call_operand.vmem [shape: f32[8,128], index: 0, kind: input, shape index: {}]
  %s1 = inlined_call_operand.hbm [shape: f32[128,128], index: 1, kind: input, shape index: {}]
  %s2 = inlined_call_operand.vmem [shape: f32[1,128], index: 2, kind: input, shape index: {}]
  %s3 = inlined_call_operand.hbm [shape: f32[128,128], index: 3, kind: input, shape index: {}]
  %s4 = inlined_call_operand.vmem [shape: f32[1,128], index: 4, kind: input, shape index: {}]
  %s5 = inlined_call_operand.hbm [shape: f32[128,128], index: 5, kind: input, shape index: {}]
  %s6 = inlined_call_operand.vmem [shape: f32[1,128], index: 6, kind: input, shape index: {}]
  %s7 = inlined_call_operand.hbm [shape: f32[8,128], index: 7, kind: output, shape index: {}]
  %s8 = sld [smem:[#allocation0]]
  $region50: #{torch_module_forward.1} parent=0
    _
  %s10 = ssub.s32 1, %s8
  %s11 = scalar_select 0, %s10, %s8
  $region1: #{torch_module_forward.1} parent=0
    #allocation2 [shape = 'u8[65536]{0}', space=vmem, size = 0x10000, scoped, tag = 'input window, operand 1, single buffered']
    #allocation3 [shape = 's32[1]{0}', space=sflag, size = 0x4, scoped, tag = 'scoped memory for torch_module_forward.1']
    #allocation4 [shape = 's32[1]{0}', space=sflag, size = 0x4, scoped, tag = 'scoped memory for torch_module_forward.1']
    #allocation5 [shape = 'u8[65536]{0}', space=vmem, size = 0x10000, scoped, tag = 'input window, operand 3, single buffered']
    #allocation6 [shape = 's32[1]{0}', space=sflag, size = 0x4, scoped, tag = 'scoped memory for torch_module_forward.1']
    #allocation7 [shape = 'u8[65536]{0}', space=vmem, size = 0x10000, scoped, tag = 'input window, operand 5, single buffered']
    #allocation8 [shape = 'u8[4096]{0}', space=vmem, size = 0x1000, scoped, tag = 'output window, operand 0, single buffered']
    %12 = vsyncpa [#allocation3], 0
    %13 = vsyncpa [#allocation6], 0
    %14 = vsyncpa [#allocation4], 0
    // Predicated region
    $region2: #{torch_module_forward.1} parent=1 // pred_check
      _
    $region3: #{torch_module_forward.1} parent=1 // pred_check_branch
      %16 = sbr.rel (0) target = $region5
    $region4: #{torch_module_forward.1} parent=1 // pred_region
      _
    $region5: #{torch_module_forward.1} parent=1 // pred_fallthru
      _
    // Predicated region
    $region6: #{torch_module_forward.1} parent=1 // pred_check
      _
    $region7: #{torch_module_forward.1} parent=1 // pred_check_branch
      %18 = sbr.rel (0) target = $region9
    $region8: #{torch_module_forward.1} parent=1 // pred_region
      %s20 = ssub.s32 2048, 2048
      %21 = vsyncadd [#allocation3], %s20
      %s22 = sshll.u32 [#allocation2], 4
      %s23 = int_to_ptr.vmem [resolvable:$true] %s22
      %28 = dma.hbm_to_vmem [thread:$0]  %s1, 2048, %s23, [#allocation3], 128, 128, 8
    $region9: #{torch_module_forward.1} parent=1 // pred_fallthru
      _
    // Predicated region
    $region10: #{torch_module_forward.1} parent=1 // pred_check
      _
    $region11: #{torch_module_forward.1} parent=1 // pred_check_branch
      %30 = sbr.rel (0) target = $region13
    $region12: #{torch_module_forward.1} parent=1 // pred_region
      _
    $region13: #{torch_module_forward.1} parent=1 // pred_fallthru
      _
    // Predicated region
    $region14: #{torch_module_forward.1} parent=1 // pred_check
      _
    $region15: #{torch_module_forward.1} parent=1 // pred_check_branch
      %32 = sbr.rel (0) target = $region17
    $region16: #{torch_module_forward.1} parent=1 // pred_region
      %s34 = ssub.s32 2048, 2048
      %35 = vsyncadd [#allocation6], %s34
      %s36 = sshll.u32 [#allocation5], 4
      %s37 = int_to_ptr.vmem [resolvable:$true] %s36
      %42 = dma.hbm_to_vmem [thread:$0]  %s3, 2048, %s37, [#allocation6], 128, 128, 8
    $region17: #{torch_module_forward.1} parent=1 // pred_fallthru
      _
    // Predicated region
    $region18: #{torch_module_forward.1} parent=1 // pred_check
      _
    $region19: #{torch_module_forward.1} parent=1 // pred_check_branch
      %44 = sbr.rel (0) target = $region21
    $region20: #{torch_module_forward.1} parent=1 // pred_region
      _
    $region21: #{torch_module_forward.1} parent=1 // pred_fallthru
      _
    // Predicated region
    $region22: #{torch_module_forward.1} parent=1 // pred_check
      _
    $region23: #{torch_module_forward.1} parent=1 // pred_check_branch
      %46 = sbr.rel (0) target = $region25
    $region24: #{torch_module_forward.1} parent=1 // pred_region
      %s48 = ssub.s32 2048, 2048
      %49 = vsyncadd [#allocation6], %s48
      %s50 = sshll.u32 [#allocation7], 4
      %s51 = int_to_ptr.vmem [resolvable:$true] %s50
      %56 = dma.hbm_to_vmem [thread:$0]  %s5, 2048, %s51, [#allocation6], 128, 128, 8
    $region25: #{torch_module_forward.1} parent=1 // pred_fallthru
      _
    // Predicated region
    $region26: #{torch_module_forward.1} parent=1 // pred_check
      _
    $region27: #{torch_module_forward.1} parent=1 // pred_check_branch
      %58 = sbr.rel (0) target = $region29
    $region28: #{torch_module_forward.1} parent=1 // pred_region
      _
    $region29: #{torch_module_forward.1} parent=1 // pred_fallthru
      _
    // Predicated region
    $region30: #{torch_module_forward.1} parent=1 // pred_check
      _
    $region31: #{torch_module_forward.1} parent=1 // pred_check_branch
      %60 = sbr.rel (0) target = $region33
    $region32: #{torch_module_forward.1} parent=1 // pred_region
      %61 = dma.done [#allocation3], 2048
    $region33: #{torch_module_forward.1} parent=1 // pred_fallthru
      _
    // Predicated region
    $region34: #{torch_module_forward.1} parent=1 // pred_check
      _
    $region35: #{torch_module_forward.1} parent=1 // pred_check_branch
      %63 = sbr.rel (0) target = $region37
    $region36: #{torch_module_forward.1} parent=1 // pred_region
      %64 = dma.done [#allocation6], 2048
    $region37: #{torch_module_forward.1} parent=1 // pred_fallthru
      _
    // Predicated region
    $region38: #{torch_module_forward.1} parent=1 // pred_check
      _
    $region39: #{torch_module_forward.1} parent=1 // pred_check_branch
      %66 = sbr.rel (0) target = $region41
    $region40: #{torch_module_forward.1} parent=1 // pred_region
      %67 = dma.done [#allocation6], 2048
    $region41: #{torch_module_forward.1} parent=1 // pred_fallthru
      _
    %v68 = vld [vmem:[%s0] sm:$0xff]
    %v69 = vld [vmem:[#allocation2] sm:$0xff]
    %v70 = vld [vmem:[#allocation2 + $0x8] sm:$0xff]
    %v71 = vld [vmem:[#allocation2 + $0x10] sm:$0xff]
    %v72 = vld [vmem:[#allocation2 + $0x18] sm:$0xff]
    %v73 = vld [vmem:[#allocation2 + $0x20] sm:$0xff]
    %v74 = vld [vmem:[#allocation2 + $0x28] sm:$0xff]
    %v75 = vld [vmem:[#allocation2 + $0x30] sm:$0xff]
    %v76 = vld [vmem:[#allocation2 + $0x38] sm:$0xff]
    %v77 = vld [vmem:[#allocation2 + $0x40] sm:$0xff]
    %v78 = vld [vmem:[#allocation2 + $0x48] sm:$0xff]
    %v79 = vld [vmem:[#allocation2 + $0x50] sm:$0xff]
    %v80 = vld [vmem:[#allocation2 + $0x58] sm:$0xff]
    %v81 = vld [vmem:[#allocation2 + $0x60] sm:$0xff]
    %v82 = vld [vmem:[#allocation2 + $0x68] sm:$0xff]
    %v83 = vld [vmem:[#allocation2 + $0x70] sm:$0xff]
    %v84 = vld [vmem:[#allocation2 + $0x78] sm:$0xff]
    %v85 = vld [vmem:[%s2] sm:$0x1]
    %v87 = vlaneseq
    %v88 = vshrl.u32 %v87, 7
    %v89 = vsub.s32 0, %v88
    %v90 = vrot.slane %v85, %v89
    %92 = vmatprep.subr.mxu0 0.0
    %93 = vmatpush1.msra.mxu0 %v84
    %94 = vmatprep.subr.mxu0 0.0
    %95 = vmatpush1.msra.mxu0 %v83
    %96 = vmatprep.subr.mxu0 0.0
    %97 = vmatpush1.msra.mxu0 %v82
    %98 = vmatprep.subr.mxu0 0.0
    %99 = vmatpush1.msra.mxu0 %v81
    %100 = vmatprep.subr.mxu0 0.0
    %101 = vmatpush1.msra.mxu0 %v80
    %102 = vmatprep.subr.mxu0 0.0
    %103 = vmatpush1.msra.mxu0 %v79
    %104 = vmatprep.subr.mxu0 0.0
    %105 = vmatpush1.msra.mxu0 %v78
    %106 = vmatprep.subr.mxu0 0.0
    %107 = vmatpush1.msra.mxu0 %v77
    %108 = vmatprep.subr.mxu0 0.0
    %109 = vmatpush1.msra.mxu0 %v76
    %110 = vmatprep.subr.mxu0 0.0
    %111 = vmatpush1.msra.mxu0 %v75
    %112 = vmatprep.subr.mxu0 0.0
    %113 = vmatpush1.msra.mxu0 %v74
    %114 = vmatprep.subr.mxu0 0.0
    %115 = vmatpush1.msra.mxu0 %v73
    %116 = vmatprep.subr.mxu0 0.0
    %117 = vmatpush1.msra.mxu0 %v72
    %118 = vmatprep.subr.mxu0 0.0
    %119 = vmatpush1.msra.mxu0 %v71
    %120 = vmatprep.subr.mxu0 0.0
    %121 = vmatpush1.msra.mxu0 %v70
    %122 = vmatprep.subr.mxu0 0.0
    %123 = vmatpush1.msra.mxu0 %v69
    %124 = vmatprep.subr.mxu0 0.0
    %125 = vmatpush2.msra.mxu0 0.0
    %126 = vmatprep.subr.mxu0 0.0
    %127 = vmatpush2.msra.mxu0 0.0
    %128 = vmatprep.subr.mxu0 0.0
    %129 = vmatpush2.msra.mxu0 0.0
    %130 = vmatprep.subr.mxu0 0.0
    %131 = vmatpush2.msra.mxu0 0.0
    %132 = vmatprep.subr.mxu0 0.0
    %133 = vmatpush2.msra.mxu0 0.0
    %134 = vmatprep.subr.mxu0 0.0
    %135 = vmatpush2.msra.mxu0 0.0
    %136 = vmatprep.subr.mxu0 0.0
    %137 = vmatpush2.msra.mxu0 0.0
    %138 = vmatprep.subr.mxu0 0.0
    %139 = vmatpush2.msra.mxu0 0.0
    %140 = vmatprep.subr.mxu0 0.0
    %141 = vmatpush2.msra.mxu0 0.0
    %142 = vmatprep.subr.mxu0 0.0
    %143 = vmatpush2.msra.mxu0 0.0
    %144 = vmatprep.subr.mxu0 0.0
    %145 = vmatpush2.msra.mxu0 0.0
    %146 = vmatprep.subr.mxu0 0.0
    %147 = vmatpush2.msra.mxu0 0.0
    %148 = vmatprep.subr.mxu0 0.0
    %149 = vmatpush2.msra.mxu0 0.0
    %150 = vmatprep.subr.mxu0 0.0
    %151 = vmatpush2.msra.mxu0 0.0
    %152 = vmatprep.subr.mxu0 0.0
    %153 = vmatpush2.msra.mxu0 0.0
    %154 = vmatprep.subr.mxu0 0.0
    %155 = vmatpush2.msra.mxu0 0.0
    %156 = vmatprep.mubr.f32.mxu0 0.0
    %157 = vmatmul.mubr.f32.gmra.mxu0 %v68
    %v158 = vpop.f32.mrf.mxu0
    %v159 = vadd.f32 %v90, %v158
    %v160 = vpop.f32.mrf.mxu0
    %161 = vdwg.mxu0
    %v162 = vtanh.pop %v159
    %v163 = vld [vmem:[#allocation5] sm:$0xff]
    %v164 = vld [vmem:[#allocation5 + $0x8] sm:$0xff]
    %v165 = vld [vmem:[#allocation5 + $0x10] sm:$0xff]
    %v166 = vld [vmem:[#allocation5 + $0x18] sm:$0xff]
    %v167 = vld [vmem:[#allocation5 + $0x20] sm:$0xff]
    %v168 = vld [vmem:[#allocation5 + $0x28] sm:$0xff]
    %v169 = vld [vmem:[#allocation5 + $0x30] sm:$0xff]
    %v170 = vld [vmem:[#allocation5 + $0x38] sm:$0xff]
    %v171 = vld [vmem:[#allocation5 + $0x40] sm:$0xff]
    %v172 = vld [vmem:[#allocation5 + $0x48] sm:$0xff]
    %v173 = vld [vmem:[#allocation5 + $0x50] sm:$0xff]
    %v174 = vld [vmem:[#allocation5 + $0x58] sm:$0xff]
    %v175 = vld [vmem:[#allocation5 + $0x60] sm:$0xff]
    %v176 = vld [vmem:[#allocation5 + $0x68] sm:$0xff]
    %v177 = vld [vmem:[#allocation5 + $0x70] sm:$0xff]
    %v178 = vld [vmem:[#allocation5 + $0x78] sm:$0xff]
    %v179 = vld [vmem:[%s4] sm:$0x1]
    %v181 = vlaneseq
    %v182 = vshrl.u32 %v181, 7
    %v183 = vsub.s32 0, %v182
    %v184 = vrot.slane %v179, %v183
    %186 = vmatprep.subr.mxu0 0.0
    %187 = vmatpush1.msra.mxu0 %v178
    %188 = vmatprep.subr.mxu0 0.0
    %189 = vmatpush1.msra.mxu0 %v177
    %190 = vmatprep.subr.mxu0 0.0
    %191 = vmatpush1.msra.mxu0 %v176
    %192 = vmatprep.subr.mxu0 0.0
    %193 = vmatpush1.msra.mxu0 %v175
    %194 = vmatprep.subr.mxu0 0.0
    %195 = vmatpush1.msra.mxu0 %v174
    %196 = vmatprep.subr.mxu0 0.0
    %197 = vmatpush1.msra.mxu0 %v173
    %198 = vmatprep.subr.mxu0 0.0
    %199 = vmatpush1.msra.mxu0 %v172
    %200 = vmatprep.subr.mxu0 0.0
    %201 = vmatpush1.msra.mxu0 %v171
    %202 = vmatprep.subr.mxu0 0.0
    %203 = vmatpush1.msra.mxu0 %v170
    %204 = vmatprep.subr.mxu0 0.0
    %205 = vmatpush1.msra.mxu0 %v169
    %206 = vmatprep.subr.mxu0 0.0
    %207 = vmatpush1.msra.mxu0 %v168
    %208 = vmatprep.subr.mxu0 0.0
    %209 = vmatpush1.msra.mxu0 %v167
    %210 = vmatprep.subr.mxu0 0.0
    %211 = vmatpush1.msra.mxu0 %v166
    %212 = vmatprep.subr.mxu0 0.0
    %213 = vmatpush1.msra.mxu0 %v165
    %214 = vmatprep.subr.mxu0 0.0
    %215 = vmatpush1.msra.mxu0 %v164
    %216 = vmatprep.subr.mxu0 0.0
    %217 = vmatpush1.msra.mxu0 %v163
    %218 = vmatprep.subr.mxu0 0.0
    %219 = vmatpush2.msra.mxu0 0.0
    %220 = vmatprep.subr.mxu0 0.0
    %221 = vmatpush2.msra.mxu0 0.0
    %222 = vmatprep.subr.mxu0 0.0
    %223 = vmatpush2.msra.mxu0 0.0
    %224 = vmatprep.subr.mxu0 0.0
    %225 = vmatpush2.msra.mxu0 0.0
    %226 = vmatprep.subr.mxu0 0.0
    %227 = vmatpush2.msra.mxu0 0.0
    %228 = vmatprep.subr.mxu0 0.0
    %229 = vmatpush2.msra.mxu0 0.0
    %230 = vmatprep.subr.mxu0 0.0
    %231 = vmatpush2.msra.mxu0 0.0
    %232 = vmatprep.subr.mxu0 0.0
    %233 = vmatpush2.msra.mxu0 0.0
    %234 = vmatprep.subr.mxu0 0.0
    %235 = vmatpush2.msra.mxu0 0.0
    %236 = vmatprep.subr.mxu0 0.0
    %237 = vmatpush2.msra.mxu0 0.0
    %238 = vmatprep.subr.mxu0 0.0
    %239 = vmatpush2.msra.mxu0 0.0
    %240 = vmatprep.subr.mxu0 0.0
    %241 = vmatpush2.msra.mxu0 0.0
    %242 = vmatprep.subr.mxu0 0.0
    %243 = vmatpush2.msra.mxu0 0.0
    %244 = vmatprep.subr.mxu0 0.0
    %245 = vmatpush2.msra.mxu0 0.0
    %246 = vmatprep.subr.mxu0 0.0
    %247 = vmatpush2.msra.mxu0 0.0
    %248 = vmatprep.subr.mxu0 0.0
    %249 = vmatpush2.msra.mxu0 0.0
    %250 = vmatprep.mubr.f32.mxu0 0.0
    %251 = vmatmul.mubr.f32.gmra.mxu0 %v162
    %v252 = vpop.f32.mrf.mxu0
    %v253 = vadd.f32 %v184, %v252
    %v254 = vpop.f32.mrf.mxu0
    %255 = vdwg.mxu0
    %v256 = vtanh.pop %v253
    %v257 = vld [vmem:[#allocation7] sm:$0xff]
    %v258 = vld [vmem:[#allocation7 + $0x8] sm:$0xff]
    %v259 = vld [vmem:[#allocation7 + $0x10] sm:$0xff]
    %v260 = vld [vmem:[#allocation7 + $0x18] sm:$0xff]
    %v261 = vld [vmem:[#allocation7 + $0x20] sm:$0xff]
    %v262 = vld [vmem:[#allocation7 + $0x28] sm:$0xff]
    %v263 = vld [vmem:[#allocation7 + $0x30] sm:$0xff]
    %v264 = vld [vmem:[#allocation7 + $0x38] sm:$0xff]
    %v265 = vld [vmem:[#allocation7 + $0x40] sm:$0xff]
    %v266 = vld [vmem:[#allocation7 + $0x48] sm:$0xff]
    %v267 = vld [vmem:[#allocation7 + $0x50] sm:$0xff]
    %v268 = vld [vmem:[#allocation7 + $0x58] sm:$0xff]
    %v269 = vld [vmem:[#allocation7 + $0x60] sm:$0xff]
    %v270 = vld [vmem:[#allocation7 + $0x68] sm:$0xff]
    %v271 = vld [vmem:[#allocation7 + $0x70] sm:$0xff]
    %v272 = vld [vmem:[#allocation7 + $0x78] sm:$0xff]
    %v273 = vld [vmem:[%s6] sm:$0x1]
    %v275 = vlaneseq
    %v276 = vshrl.u32 %v275, 7
    %v277 = vsub.s32 0, %v276
    %v278 = vrot.slane %v273, %v277
    %280 = vmatprep.subr.mxu0 0.0
    %281 = vmatpush1.msra.mxu0 %v272
    %282 = vmatprep.subr.mxu0 0.0
    %283 = vmatpush1.msra.mxu0 %v271
    %284 = vmatprep.subr.mxu0 0.0
    %285 = vmatpush1.msra.mxu0 %v270
    %286 = vmatprep.subr.mxu0 0.0
    %287 = vmatpush1.msra.mxu0 %v269
    %288 = vmatprep.subr.mxu0 0.0
    %289 = vmatpush1.msra.mxu0 %v268
    %290 = vmatprep.subr.mxu0 0.0
    %291 = vmatpush1.msra.mxu0 %v267
    %292 = vmatprep.subr.mxu0 0.0
    %293 = vmatpush1.msra.mxu0 %v266
    %294 = vmatprep.subr.mxu0 0.0
    %295 = vmatpush1.msra.mxu0 %v265
    %296 = vmatprep.subr.mxu0 0.0
    %297 = vmatpush1.msra.mxu0 %v264
    %298 = vmatprep.subr.mxu0 0.0
    %299 = vmatpush1.msra.mxu0 %v263
    %300 = vmatprep.subr.mxu0 0.0
    %301 = vmatpush1.msra.mxu0 %v262
    %302 = vmatprep.subr.mxu0 0.0
    %303 = vmatpush1.msra.mxu0 %v261
    %304 = vmatprep.subr.mxu0 0.0
    %305 = vmatpush1.msra.mxu0 %v260
    %306 = vmatprep.subr.mxu0 0.0
    %307 = vmatpush1.msra.mxu0 %v259
    %308 = vmatprep.subr.mxu0 0.0
    %309 = vmatpush1.msra.mxu0 %v258
    %310 = vmatprep.subr.mxu0 0.0
    %311 = vmatpush1.msra.mxu0 %v257
    %312 = vmatprep.subr.mxu0 0.0
    %313 = vmatpush2.msra.mxu0 0.0
    %314 = vmatprep.subr.mxu0 0.0
    %315 = vmatpush2.msra.mxu0 0.0
    %316 = vmatprep.subr.mxu0 0.0
    %317 = vmatpush2.msra.mxu0 0.0
    %318 = vmatprep.subr.mxu0 0.0
    %319 = vmatpush2.msra.mxu0 0.0
    %320 = vmatprep.subr.mxu0 0.0
    %321 = vmatpush2.msra.mxu0 0.0
    %322 = vmatprep.subr.mxu0 0.0
    %323 = vmatpush2.msra.mxu0 0.0
    %324 = vmatprep.subr.mxu0 0.0
    %325 = vmatpush2.msra.mxu0 0.0
    %326 = vmatprep.subr.mxu0 0.0
    %327 = vmatpush2.msra.mxu0 0.0
    %328 = vmatprep.subr.mxu0 0.0
    %329 = vmatpush2.msra.mxu0 0.0
    %330 = vmatprep.subr.mxu0 0.0
    %331 = vmatpush2.msra.mxu0 0.0
    %332 = vmatprep.subr.mxu0 0.0
    %333 = vmatpush2.msra.mxu0 0.0
    %334 = vmatprep.subr.mxu0 0.0
    %335 = vmatpush2.msra.mxu0 0.0
    %336 = vmatprep.subr.mxu0 0.0
    %337 = vmatpush2.msra.mxu0 0.0
    %338 = vmatprep.subr.mxu0 0.0
    %339 = vmatpush2.msra.mxu0 0.0
    %340 = vmatprep.subr.mxu0 0.0
    %341 = vmatpush2.msra.mxu0 0.0
    %342 = vmatprep.subr.mxu0 0.0
    %343 = vmatpush2.msra.mxu0 0.0
    %344 = vmatprep.mubr.f32.mxu0 0.0
    %345 = vmatmul.mubr.f32.gmra.mxu0 %v256
    %v346 = vpop.f32.mrf.mxu0
    %v347 = vadd.f32 %v278, %v346
    %v348 = vpop.f32.mrf.mxu0
    %349 = vdwg.mxu0
    %v350 = vtanh.pop %v347
    %351 = vst [vmem:[#allocation8] sm:$0xff] %v350
    // Predicated region
    $region42: #{torch_module_forward.1} parent=1 // pred_check
      _
    $region43: #{torch_module_forward.1} parent=1 // pred_check_branch
      %353 = sbr.rel (0) target = $region45
    $region44: #{torch_module_forward.1} parent=1 // pred_region
      %s355 = ssub.s32 128, 128
      %356 = vsyncadd [#allocation4], %s355
      %s358 = sshll.u32 [#allocation8], 4
      %s359 = int_to_ptr.vmem [resolvable:$true] %s358
      %361 = dma.vmem_to_hbm [thread:$0]  %s359, 128, %s7, [#allocation4]
    $region45: #{torch_module_forward.1} parent=1 // pred_fallthru
      _
    // Predicated region
    $region46: #{torch_module_forward.1} parent=1 // pred_check
      _
    $region47: #{torch_module_forward.1} parent=1 // pred_check_branch
      %363 = sbr.rel (0) target = $region49
    $region48: #{torch_module_forward.1} parent=1 // pred_region
      %364 = dma.done [#allocation4], 128
    $region49: #{torch_module_forward.1} parent=1 // pred_fallthru
      _
    %365 = vsyncpa [#allocation3], 1
    %366 = vsyncpa [#allocation6], 1
    %367 = vsyncpa [#allocation4], 1

</llo_original>
